<compile_context>
chip_gen: v7x
topology: tpu7x:2x2x1
jax: 0.10.0
libtpu: 0.0.40
codegen_flags: <defaults>
</compile_context>

<pallas_src>
import functools
import math

import jax
import jax.numpy as jnp
import numpy as np
from jax import lax
from jax.experimental import pallas as pl
from jax.experimental.pallas import tpu as pltpu

_NEG_INF = -1e30  # finite sentinel: avoids inf - inf -> NaN on masked entries


# --------------------------------------------------------------------------------------
# Small helpers (chip-aware defaults)
# --------------------------------------------------------------------------------------
def _round_up(x, m):
    return ((x + m - 1) // m) * m


def _default_block_size():
    """128 on v5e (4x128^2 MXU), 256 on v6e/v7x (2x256^2 MXU)."""
    try:
        kind = jax.devices()[0].device_kind.lower()
    except Exception:
        return 256
    if "v5 lite" in kind or "v5lite" in kind or "v5e" in kind:
        return 128
    return 256


def _vmem_limit_bytes():
    """Leave headroom on v7x's 64 MiB/TC VMEM; 64 MiB is safe on v5e/v6e (128 MiB)."""
    try:
        kind = jax.devices()[0].device_kind.lower()
    except Exception:
        return 64 * 1024 * 1024
    if "v7" in kind:
        return 48 * 1024 * 1024
    return 64 * 1024 * 1024


def _tiles(T, target):
    """Pick a q/kv tile size and padded sequence length such that blk | T_pad."""
    if T <= target:
        blk = _round_up(T, 8)
        return blk, blk
    return target, _round_up(T, target)


# --------------------------------------------------------------------------------------
# Kernel 1: fused QKV projection -> per-head (B, H, T, D) layout (q pre-scaled via W).
# --------------------------------------------------------------------------------------
def _qkv_proj_kernel(x_ref, w_ref, b_ref, q_ref, k_ref, v_ref, *, n_head):
    """One (batch, T-block) step: qkv = x @ W_qkv + b; split into heads.

    x_ref: (blk, C) compute dtype      w_ref: (C, 3C) compute dtype (q cols pre-scaled)
    b_ref: (1, 3C) f32 (q third pre-scaled)    q/k/v_ref: (H, blk, D) compute dtype
    """
    C = x_ref.shape[-1]
    D = C // n_head

    qkv = jnp.dot(x_ref[...], w_ref[...],
                  preferred_element_type=jnp.float32) + b_ref[...]   # (blk, 3C) f32
    qkv = qkv.astype(q_ref.dtype)        # single cast of the whole tile

    for h in range(n_head):              # small static loop over heads
        lo = h * D
        q_ref[h] = qkv[:, lo:lo + D]
        k_ref[h] = qkv[:, C + lo:C + lo + D]
        v_ref[h] = qkv[:, 2 * C + lo:2 * C + lo + D]


# --------------------------------------------------------------------------------------
# Kernel 2: flash attention (heads + kv in-kernel) fused with the output projection.
# --------------------------------------------------------------------------------------
def _flash_attn_proj_kernel(q_ref, k_ref, v_ref, wp_ref, bp_ref, o_ref, y_sc, *,
                            n_head, blk, approx_recip):
    """One (batch, q-block) grid step.

    q_ref : (H, blk, D) compute dtype (q pre-scaled by 1/sqrt(D))
    k_ref : (H, T, D)   v_ref: (H, T, D)   -- full per-batch K/V resident in VMEM
    wp_ref: (C, C) compute dtype   bp_ref: (1, C) f32
    o_ref : (blk, C) output block (written exactly once)
    y_sc  : (blk, C) f32 head-concatenated attention-output scratch
    """
    qi = pl.program_id(1)
    D = q_ref.shape[-1]
    num_kv = qi + 1                      # causal: kv tiles above the diagonal skipped

    def _mask_diag(t):
        row = lax.broadcasted_iota(jnp.int32, t.shape, 0)
        col = lax.broadcasted_iota(jnp.int32, t.shape, 1)
        return jnp.where(row >= col, t, _NEG_INF)

    for h in range(n_head):              # static head loop (head axis off the grid)
        q = q_ref[h]                                              # (blk, D)

        def kv_step(ki, carry):
            m_prev, l_prev, acc_prev = carry
            start = pl.multiple_of(ki * blk, blk)
            k_blk = k_ref[h, pl.ds(start, blk), :]                # (blk, D)
            v_blk = v_ref[h, pl.ds(start, blk), :]                # (blk, D)
            # q @ k^T, contracting D on the MXU with f32 accumulation.
            s = lax.dot_general(q, k_blk, (((1,), (1,)), ((), ())),
                                preferred_element_type=jnp.float32)   # (blk, blk)
            # Causal mask is only needed on the diagonal tile.
            s = lax.cond(ki == qi, _mask_diag, lambda t: t, s)
            m_new = jnp.maximum(m_prev, jnp.max(s, axis=-1, keepdims=True))
            alpha = jnp.exp(m_prev - m_new)
            p = jnp.exp(s - m_new)                                # (blk, blk) f32
            l_new = alpha * l_prev + jnp.sum(p, axis=-1, keepdims=True)
            acc_new = alpha * acc_prev + jnp.dot(
                p.astype(v_blk.dtype), v_blk, preferred_element_type=jnp.float32)
            return m_new, l_new, acc_new

        m0 = jnp.full((blk, 1), _NEG_INF, jnp.float32)
        l0 = jnp.zeros((blk, 1), jnp.float32)
        a0 = jnp.zeros((blk, D), jnp.float32)
        _, l_fin, acc_fin = lax.fori_loop(0, num_kv, kv_step, (m0, l0, a0))

        y_h = acc_fin * pl.reciprocal(l_fin, approx=approx_recip)     # (blk, D) f32
        y_sc[:, h * D:(h + 1) * D] = y_h                              # static lane slice

    # Single full-C MXU contraction for the output projection, one lane-dense store.
    y = y_sc[...].astype(wp_ref.dtype)                                # (blk, C)
    out = jnp.dot(y, wp_ref[...], preferred_element_type=jnp.float32) + bp_ref[...]
    o_ref[...] = out.astype(o_ref.dtype)


# --------------------------------------------------------------------------------------
# Wrapper
# --------------------------------------------------------------------------------------
def causal_self_attention(x, w_qkv, b_qkv, w_proj, b_proj, *, n_head,
                          compute_dtype=jnp.bfloat16, block_size=None):
    """Forward pass of CausalSelfAttention (eval mode).

    x: (B, T, C); w_qkv: (C, 3C); b_qkv: (1, 3C); w_proj: (C, C); b_proj: (1, C).
    compute_dtype: MXU operand dtype (bf16 recommended); stats/accumulation stay f32.
    block_size:    q/kv tile target; default is chip-dependent (128 v5e, 256 v6e/v7x).
    """
    B, T, C = x.shape
    assert C % n_head == 0
    D = C // n_head
    out_dtype = x.dtype
    compute_dtype = jnp.dtype(compute_dtype)
    # Exact EUP reciprocal unless the caller only needs reduced output precision.
    approx_recip = jnp.dtype(out_dtype) != jnp.dtype(jnp.float32)

    if block_size is None:
        block_size = _default_block_size()
    blk, T_pad = _tiles(T, block_size)
    n_blk = T_pad // blk
    vmem_limit = _vmem_limit_bytes()

    if T_pad != T:
        # Zero-pad the sequence; padded keys are above every real row's diagonal.
        x = jnp.pad(x, ((0, 0), (0, T_pad - T), (0, 0)))

    # Fold the 1/sqrt(D) attention scale into the q columns of W_qkv / b_qkv.
    scale = 1.0 / math.sqrt(D)
    col_scale = jnp.concatenate([jnp.full((C,), scale, jnp.float32),
                                 jnp.ones((2 * C,), jnp.float32)])
    wqkv_c = (jnp.asarray(w_qkv, jnp.float32) * col_scale[None, :]).astype(compute_dtype)
    bqkv_f = jnp.asarray(b_qkv, jnp.float32).reshape(1, 3 * C) * col_scale[None, :]
    wproj_c = jnp.asarray(w_proj).astype(compute_dtype)
    bproj_f = jnp.asarray(b_proj, jnp.float32).reshape(1, C)
    xc = x.astype(compute_dtype)

    # ---- Kernel 1: QKV projection -> (B, H, T, D) per-head slabs. ----
    q, k, v = pl.pallas_call(
        functools.partial(_qkv_proj_kernel, n_head=n_head),
        out_shape=tuple(jax.ShapeDtypeStruct((B, n_head, T_pad, D), compute_dtype)
                        for _ in range(3)),
        grid=(B, n_blk),
        in_specs=[
            pl.BlockSpec((pl.Squeezed(), blk, C), lambda b, t: (b, t, 0)),   # x
            pl.BlockSpec((C, 3 * C), lambda b, t: (0, 0)),                   # W_qkv
            pl.BlockSpec((1, 3 * C), lambda b, t: (0, 0)),                   # b_qkv
        ],
        out_specs=tuple(
            pl.BlockSpec((pl.Squeezed(), n_head, blk, D), lambda b, t: (b, 0, t, 0))
            for _ in range(3)),
        compiler_params=pltpu.CompilerParams(
            dimension_semantics=("parallel", "parallel"),
            vmem_limit_bytes=vmem_limit),
    )(xc, wqkv_c, bqkv_f)

    # ---- Kernel 2: flash attention (in-kernel head/kv loops) + fused projection. ----
    out = pl.pallas_call(
        functools.partial(_flash_attn_proj_kernel, n_head=n_head, blk=blk,
                          approx_recip=approx_recip),
        out_shape=jax.ShapeDtypeStruct((B, T_pad, C), out_dtype),
        grid=(B, n_blk),
        in_specs=[
            pl.BlockSpec((pl.Squeezed(), n_head, blk, D),
                         lambda b, qi: (b, 0, qi, 0)),                        # q
            pl.BlockSpec((pl.Squeezed(), n_head, T_pad, D),
                         lambda b, qi: (b, 0, 0, 0)),                         # full K
            pl.BlockSpec((pl.Squeezed(), n_head, T_pad, D),
                         lambda b, qi: (b, 0, 0, 0)),                         # full V
            pl.BlockSpec((C, C), lambda b, qi: (0, 0)),                       # W_proj
            pl.BlockSpec((1, C), lambda b, qi: (0, 0)),                       # b_proj
        ],
        out_specs=pl.BlockSpec((pl.Squeezed(), blk, C), lambda b, qi: (b, qi, 0)),
        scratch_shapes=[pltpu.VMEM((blk, C), jnp.float32)],                   # y (heads)
        compiler_params=pltpu.CompilerParams(
            dimension_semantics=("parallel", "parallel"),
            vmem_limit_bytes=vmem_limit),
    )(q, k, v, wproj_c, bproj_f)

    if T_pad != T:
        out = out[:, :T, :]
    return out


# --------------------------------------------------------------------------------------
# Reference + self-test
# --------------------------------------------------------------------------------------
def _reference(x, w_qkv, b_qkv, w_proj, b_proj, n_head):
    """Pure-JAX reference mirroring the PyTorch forward (eval mode)."""
    B, T, C = x.shape
    D = C // n_head
    hp = lax.Precision.HIGHEST
    qkv = jnp.einsum('btc,cd->btd', x, w_qkv, precision=hp) + b_qkv.reshape(-1)
    q, k, v = jnp.split(qkv, 3, axis=-1)
    q = q.reshape(B, T, n_head, D).transpose(0, 2, 1, 3)
    k = k.reshape(B, T, n_head, D).transpose(0, 2, 1, 3)
    v = v.reshape(B, T, n_head, D).transpose(0, 2, 1, 3)
    att = jnp.einsum('bhtd,bhsd->bhts', q, k, precision=hp) / math.sqrt(D)
    mask = jnp.tril(jnp.ones((T, T), dtype=bool))
    att = jnp.where(mask[None, None], att, -jnp.inf)
    att = jax.nn.softmax(att, axis=-1)
    y = jnp.einsum('bhts,bhsd->bhtd', att, v, precision=hp)
    y = y.transpose(0, 2, 1, 3).reshape(B, T, C)
    return jnp.einsum('btc,cd->btd', y, w_proj, precision=hp) + b_proj.reshape(-1)


def _run_case(B, T, C, n_head, compute_dtype, block_size, tol):
    key = jax.random.PRNGKey(0)
    kx, kw1, kb1, kw2, kb2 = jax.random.split(key, 5)
    bound = 1.0 / math.sqrt(C)
    w_qkv = jax.random.uniform(kw1, (C, 3 * C), jnp.float32, -bound, bound)
    b_qkv = jax.random.uniform(kb1, (1, 3 * C), jnp.float32, -bound, bound)
    w_proj = jax.random.uniform(kw2, (C, C), jnp.float32, -bound, bound)
    b_proj = jax.random.uniform(kb2, (1, C), jnp.float32, -bound, bound)
    x = jax.random.normal(kx, (B, T, C), jnp.float32)

    y = causal_self_attention(x, w_qkv, b_qkv, w_proj, b_proj, n_head=n_head,
                              compute_dtype=compute_dtype, block_size=block_size)
    y = jax.block_until_ready(y)
    y_ref = _reference(x, w_qkv, b_qkv, w_proj, b_proj, n_head)
    np.testing.assert_allclose(np.asarray(y, dtype=np.float32),
                               np.asarray(y_ref, dtype=np.float32),
                               rtol=tol, atol=tol)


if __name__ == "__main__":
    # Small config consistent with the module: B=2, block_size T=8, C=32, 4 heads.
    _run_case(2, 8, 32, 4, jnp.float32, None, 2e-3)
    # Multi-block causal path (4 q-tiles of 8): exercises the dynamic kv fori_loop
    # bound, diagonal-only masking and the in-kernel head loop / fused projection.
    _run_case(2, 32, 32, 4, jnp.float32, 8, 2e-3)
    # bf16 MXU fast path (f32 softmax statistics / accumulation, exact reciprocal).
    _run_case(2, 32, 32, 4, jnp.bfloat16, 8, 5e-2)
    print("KERNEL_OK")
</pallas_src>

<mosaic_0001>
module attributes {stable_mosaic.version = 11 : i64} {
  func.func @_qkv_proj_kernel(%arg0: i32, %arg1: i32, %arg2: memref<1x8x32xf32, #tpu.memory_space<vmem>>, %arg3: memref<32x96xf32, #tpu.memory_space<vmem>>, %arg4: memref<1x96xf32, #tpu.memory_space<vmem>>, %arg5: memref<1x4x8x8xf32, #tpu.memory_space<vmem>>, %arg6: memref<1x4x8x8xf32, #tpu.memory_space<vmem>>, %arg7: memref<1x4x8x8xf32, #tpu.memory_space<vmem>>) attributes {dimension_semantics = [#tpu.dimension_semantics<parallel>, #tpu.dimension_semantics<parallel>], iteration_bounds = array<i64: 2, 1>, scalar_prefetch = 0 : i64, scratch_operands = 0 : i64, tpu.core_type = #tpu.core_type<tc>, window_params = [{transform_indices = @transform_0, window_bounds = array<i64: 1, 8, 32>}, {pipeline_mode = #tpu.pipeline_mode<synchronous>, transform_indices = @transform_1, window_bounds = array<i64: 32, 96>}, {pipeline_mode = #tpu.pipeline_mode<synchronous>, transform_indices = @transform_2, window_bounds = array<i64: 1, 96>}, {transform_indices = @transform_3, window_bounds = array<i64: 1, 4, 8, 8>}, {transform_indices = @transform_4, window_bounds = array<i64: 1, 4, 8, 8>}, {transform_indices = @transform_5, window_bounds = array<i64: 1, 4, 8, 8>}]} {
    %c0 = arith.constant 0 : index
    %c0_0 = arith.constant 0 : index
    %c0_1 = arith.constant 0 : index
    %0 = vector.load %arg2[%c0, %c0_0, %c0_1] : memref<1x8x32xf32, #tpu.memory_space<vmem>>, vector<1x8x32xf32>
    %1 = vector.shape_cast %0 : vector<1x8x32xf32> to vector<8x32xf32>
    %c0_2 = arith.constant 0 : index
    %c0_3 = arith.constant 0 : index
    %2 = vector.load %arg3[%c0_2, %c0_3] : memref<32x96xf32, #tpu.memory_space<vmem>>, vector<32x96xf32>
    %cst = arith.constant dense<0.000000e+00> : vector<8x96xf32>
    %3 = tpu.matmul %1, %2, %cst {dimension_numbers = #tpu.dot_dimension_numbers<[1], [0], [0], [1], [0, 0, 1, 1], [], []>} : vector<8x32xf32>, vector<32x96xf32>, vector<8x96xf32> -> vector<8x96xf32>
    %c0_4 = arith.constant 0 : index
    %c0_5 = arith.constant 0 : index
    %4 = vector.load %arg4[%c0_4, %c0_5] : memref<1x96xf32, #tpu.memory_space<vmem>>, vector<1x96xf32>
    %5 = vector.broadcast %4 : vector<1x96xf32> to vector<8x96xf32>
    %6 = arith.addf %3, %5 : vector<8x96xf32>
    %7 = vector.extract_strided_slice %6 {offsets = [0, 0], sizes = [8, 8], strides = [1, 1]} : vector<8x96xf32> to vector<8x8xf32>
    %c0_6 = arith.constant 0 : index
    %c0_7 = arith.constant 0 : index
    %c0_8 = arith.constant 0 : index
    %c0_9 = arith.constant 0 : index
    %8 = vector.load %arg5[%c0_6, %c0_7, %c0_8, %c0_9] : memref<1x4x8x8xf32, #tpu.memory_space<vmem>>, vector<1x1x8x8xf32>
    %9 = vector.shape_cast %8 : vector<1x1x8x8xf32> to vector<8x8xf32>
    %10 = vector.shape_cast %7 : vector<8x8xf32> to vector<1x1x8x8xf32>
    tpu.vector_store %arg5[%c0_6, %c0_7, %c0_8, %c0_9], %10 {strides = array<i32>} : memref<1x4x8x8xf32, #tpu.memory_space<vmem>>, vector<1x1x8x8xf32>,
    %11 = vector.extract_strided_slice %6 {offsets = [0, 32], sizes = [8, 8], strides = [1, 1]} : vector<8x96xf32> to vector<8x8xf32>
    %c0_10 = arith.constant 0 : index
    %c0_11 = arith.constant 0 : index
    %c0_12 = arith.constant 0 : index
    %c0_13 = arith.constant 0 : index
    %12 = vector.load %arg6[%c0_10, %c0_11, %c0_12, %c0_13] : memref<1x4x8x8xf32, #tpu.memory_space<vmem>>, vector<1x1x8x8xf32>
    %13 = vector.shape_cast %12 : vector<1x1x8x8xf32> to vector<8x8xf32>
    %14 = vector.shape_cast %11 : vector<8x8xf32> to vector<1x1x8x8xf32>
    tpu.vector_store %arg6[%c0_10, %c0_11, %c0_12, %c0_13], %14 {strides = array<i32>} : memref<1x4x8x8xf32, #tpu.memory_space<vmem>>, vector<1x1x8x8xf32>,
    %15 = vector.extract_strided_slice %6 {offsets = [0, 64], sizes = [8, 8], strides = [1, 1]} : vector<8x96xf32> to vector<8x8xf32>
    %c0_14 = arith.constant 0 : index
    %c0_15 = arith.constant 0 : index
    %c0_16 = arith.constant 0 : index
    %c0_17 = arith.constant 0 : index
    %16 = vector.load %arg7[%c0_14, %c0_15, %c0_16, %c0_17] : memref<1x4x8x8xf32, #tpu.memory_space<vmem>>, vector<1x1x8x8xf32>
    %17 = vector.shape_cast %16 : vector<1x1x8x8xf32> to vector<8x8xf32>
    %18 = vector.shape_cast %15 : vector<8x8xf32> to vector<1x1x8x8xf32>
    tpu.vector_store %arg7[%c0_14, %c0_15, %c0_16, %c0_17], %18 {strides = array<i32>} : memref<1x4x8x8xf32, #tpu.memory_space<vmem>>, vector<1x1x8x8xf32>,
    %19 = vector.extract_strided_slice %6 {offsets = [0, 8], sizes = [8, 8], strides = [1, 1]} : vector<8x96xf32> to vector<8x8xf32>
    %c0_18 = arith.constant 0 : index
    %c1 = arith.constant 1 : index
    %c0_19 = arith.constant 0 : index
    %c0_20 = arith.constant 0 : index
    %20 = vector.load %arg5[%c0_18, %c1, %c0_19, %c0_20] : memref<1x4x8x8xf32, #tpu.memory_space<vmem>>, vector<1x1x8x8xf32>
    %21 = vector.shape_cast %20 : vector<1x1x8x8xf32> to vector<8x8xf32>
    %22 = vector.shape_cast %19 : vector<8x8xf32> to vector<1x1x8x8xf32>
    tpu.vector_store %arg5[%c0_18, %c1, %c0_19, %c0_20], %22 {strides = array<i32>} : memref<1x4x8x8xf32, #tpu.memory_space<vmem>>, vector<1x1x8x8xf32>,
    %23 = vector.extract_strided_slice %6 {offsets = [0, 40], sizes = [8, 8], strides = [1, 1]} : vector<8x96xf32> to vector<8x8xf32>
    %c0_21 = arith.constant 0 : index
    %c1_22 = arith.constant 1 : index
    %c0_23 = arith.constant 0 : index
    %c0_24 = arith.constant 0 : index
    %24 = vector.load %arg6[%c0_21, %c1_22, %c0_23, %c0_24] : memref<1x4x8x8xf32, #tpu.memory_space<vmem>>, vector<1x1x8x8xf32>
    %25 = vector.shape_cast %24 : vector<1x1x8x8xf32> to vector<8x8xf32>
    %26 = vector.shape_cast %23 : vector<8x8xf32> to vector<1x1x8x8xf32>
    tpu.vector_store %arg6[%c0_21, %c1_22, %c0_23, %c0_24], %26 {strides = array<i32>} : memref<1x4x8x8xf32, #tpu.memory_space<vmem>>, vector<1x1x8x8xf32>,
    %27 = vector.extract_strided_slice %6 {offsets = [0, 72], sizes = [8, 8], strides = [1, 1]} : vector<8x96xf32> to vector<8x8xf32>
    %c0_25 = arith.constant 0 : index
    %c1_26 = arith.constant 1 : index
    %c0_27 = arith.constant 0 : index
    %c0_28 = arith.constant 0 : index
    %28 = vector.load %arg7[%c0_25, %c1_26, %c0_27, %c0_28] : memref<1x4x8x8xf32, #tpu.memory_space<vmem>>, vector<1x1x8x8xf32>
    %29 = vector.shape_cast %28 : vector<1x1x8x8xf32> to vector<8x8xf32>
    %30 = vector.shape_cast %27 : vector<8x8xf32> to vector<1x1x8x8xf32>
    tpu.vector_store %arg7[%c0_25, %c1_26, %c0_27, %c0_28], %30 {strides = array<i32>} : memref<1x4x8x8xf32, #tpu.memory_space<vmem>>, vector<1x1x8x8xf32>,
    %31 = vector.extract_strided_slice %6 {offsets = [0, 16], sizes = [8, 8], strides = [1, 1]} : vector<8x96xf32> to vector<8x8xf32>
    %c0_29 = arith.constant 0 : index
    %c2 = arith.constant 2 : index
    %c0_30 = arith.constant 0 : index
    %c0_31 = arith.constant 0 : index
    %32 = vector.load %arg5[%c0_29, %c2, %c0_30, %c0_31] : memref<1x4x8x8xf32, #tpu.memory_space<vmem>>, vector<1x1x8x8xf32>
    %33 = vector.shape_cast %32 : vector<1x1x8x8xf32> to vector<8x8xf32>
    %34 = vector.shape_cast %31 : vector<8x8xf32> to vector<1x1x8x8xf32>
    tpu.vector_store %arg5[%c0_29, %c2, %c0_30, %c0_31], %34 {strides = array<i32>} : memref<1x4x8x8xf32, #tpu.memory_space<vmem>>, vector<1x1x8x8xf32>,
    %35 = vector.extract_strided_slice %6 {offsets = [0, 48], sizes = [8, 8], strides = [1, 1]} : vector<8x96xf32> to vector<8x8xf32>
    %c0_32 = arith.constant 0 : index
    %c2_33 = arith.constant 2 : index
    %c0_34 = arith.constant 0 : index
    %c0_35 = arith.constant 0 : index
    %36 = vector.load %arg6[%c0_32, %c2_33, %c0_34, %c0_35] : memref<1x4x8x8xf32, #tpu.memory_space<vmem>>, vector<1x1x8x8xf32>
    %37 = vector.shape_cast %36 : vector<1x1x8x8xf32> to vector<8x8xf32>
    %38 = vector.shape_cast %35 : vector<8x8xf32> to vector<1x1x8x8xf32>
    tpu.vector_store %arg6[%c0_32, %c2_33, %c0_34, %c0_35], %38 {strides = array<i32>} : memref<1x4x8x8xf32, #tpu.memory_space<vmem>>, vector<1x1x8x8xf32>,
    %39 = vector.extract_strided_slice %6 {offsets = [0, 80], sizes = [8, 8], strides = [1, 1]} : vector<8x96xf32> to vector<8x8xf32>
    %c0_36 = arith.constant 0 : index
    %c2_37 = arith.constant 2 : index
    %c0_38 = arith.constant 0 : index
    %c0_39 = arith.constant 0 : index
    %40 = vector.load %arg7[%c0_36, %c2_37, %c0_38, %c0_39] : memref<1x4x8x8xf32, #tpu.memory_space<vmem>>, vector<1x1x8x8xf32>
    %41 = vector.shape_cast %40 : vector<1x1x8x8xf32> to vector<8x8xf32>
    %42 = vector.shape_cast %39 : vector<8x8xf32> to vector<1x1x8x8xf32>
    tpu.vector_store %arg7[%c0_36, %c2_37, %c0_38, %c0_39], %42 {strides = array<i32>} : memref<1x4x8x8xf32, #tpu.memory_space<vmem>>, vector<1x1x8x8xf32>,
    %43 = vector.extract_strided_slice %6 {offsets = [0, 24], sizes = [8, 8], strides = [1, 1]} : vector<8x96xf32> to vector<8x8xf32>
    %c0_40 = arith.constant 0 : index
    %c3 = arith.constant 3 : index
    %c0_41 = arith.constant 0 : index
    %c0_42 = arith.constant 0 : index
    %44 = vector.load %arg5[%c0_40, %c3, %c0_41, %c0_42] : memref<1x4x8x8xf32, #tpu.memory_space<vmem>>, vector<1x1x8x8xf32>
    %45 = vector.shape_cast %44 : vector<1x1x8x8xf32> to vector<8x8xf32>
    %46 = vector.shape_cast %43 : vector<8x8xf32> to vector<1x1x8x8xf32>
    tpu.vector_store %arg5[%c0_40, %c3, %c0_41, %c0_42], %46 {strides = array<i32>} : memref<1x4x8x8xf32, #tpu.memory_space<vmem>>, vector<1x1x8x8xf32>,
    %47 = vector.extract_strided_slice %6 {offsets = [0, 56], sizes = [8, 8], strides = [1, 1]} : vector<8x96xf32> to vector<8x8xf32>
    %c0_43 = arith.constant 0 : index
    %c3_44 = arith.constant 3 : index
    %c0_45 = arith.constant 0 : index
    %c0_46 = arith.constant 0 : index
    %48 = vector.load %arg6[%c0_43, %c3_44, %c0_45, %c0_46] : memref<1x4x8x8xf32, #tpu.memory_space<vmem>>, vector<1x1x8x8xf32>
    %49 = vector.shape_cast %48 : vector<1x1x8x8xf32> to vector<8x8xf32>
    %50 = vector.shape_cast %47 : vector<8x8xf32> to vector<1x1x8x8xf32>
    tpu.vector_store %arg6[%c0_43, %c3_44, %c0_45, %c0_46], %50 {strides = array<i32>} : memref<1x4x8x8xf32, #tpu.memory_space<vmem>>, vector<1x1x8x8xf32>,
    %51 = vector.extract_strided_slice %6 {offsets = [0, 88], sizes = [8, 8], strides = [1, 1]} : vector<8x96xf32> to vector<8x8xf32>
    %c0_47 = arith.constant 0 : index
    %c3_48 = arith.constant 3 : index
    %c0_49 = arith.constant 0 : index
    %c0_50 = arith.constant 0 : index
    %52 = vector.load %arg7[%c0_47, %c3_48, %c0_49, %c0_50] : memref<1x4x8x8xf32, #tpu.memory_space<vmem>>, vector<1x1x8x8xf32>
    %53 = vector.shape_cast %52 : vector<1x1x8x8xf32> to vector<8x8xf32>
    %54 = vector.shape_cast %51 : vector<8x8xf32> to vector<1x1x8x8xf32>
    tpu.vector_store %arg7[%c0_47, %c3_48, %c0_49, %c0_50], %54 {strides = array<i32>} : memref<1x4x8x8xf32, #tpu.memory_space<vmem>>, vector<1x1x8x8xf32>,
    return
  }
  func.func @transform_0(%arg0: i32, %arg1: i32) -> (i32, i32, i32) {
    %c0_i32 = arith.constant 0 : i32
    %c0_i32_0 = arith.constant 0 : i32
    return %arg0, %arg1, %c0_i32 : i32, i32, i32
  }
  func.func @transform_1(%arg0: i32, %arg1: i32) -> (i32, i32) {
    %c0_i32 = arith.constant 0 : i32
    %c0_i32_0 = arith.constant 0 : i32
    %c0_i32_1 = arith.constant 0 : i32
    return %c0_i32, %c0_i32_0 : i32, i32
  }
  func.func @transform_2(%arg0: i32, %arg1: i32) -> (i32, i32) {
    %c0_i32 = arith.constant 0 : i32
    %c0_i32_0 = arith.constant 0 : i32
    %c0_i32_1 = arith.constant 0 : i32
    return %c0_i32, %c0_i32_0 : i32, i32
  }
  func.func @transform_3(%arg0: i32, %arg1: i32) -> (i32, i32, i32, i32) {
    %c0_i32 = arith.constant 0 : i32
    %c0_i32_0 = arith.constant 0 : i32
    %c0_i32_1 = arith.constant 0 : i32
    return %arg0, %c0_i32, %arg1, %c0_i32_0 : i32, i32, i32, i32
  }
  func.func @transform_4(%arg0: i32, %arg1: i32) -> (i32, i32, i32, i32) {
    %c0_i32 = arith.constant 0 : i32
    %c0_i32_0 = arith.constant 0 : i32
    %c0_i32_1 = arith.constant 0 : i32
    return %arg0, %c0_i32, %arg1, %c0_i32_0 : i32, i32, i32, i32
  }
  func.func @transform_5(%arg0: i32, %arg1: i32) -> (i32, i32, i32, i32) {
    %c0_i32 = arith.constant 0 : i32
    %c0_i32_0 = arith.constant 0 : i32
    %c0_i32_1 = arith.constant 0 : i32
    return %arg0, %c0_i32, %arg1, %c0_i32_0 : i32, i32, i32, i32
  }
}

</mosaic_0001>

<llo_original>
// kernel: tpu_custom_call.1
$region0: #{tpu_custom_call.1}
  #allocation0 [shape = 'u32[]', space=smem, size = 0x4, offset = 0x4, fixed_abs, tag = 'smem constant byte address 0x4 - core index']
  #allocation1 [shape = 'u32[144,128]{1,0:T(1,128)}', space=vmem, size = 0x12000, scoped, tag = 'internal scratch']
  %s0 = inlined_call_operand.hbm [shape: f32[2,8,32], index: 0, kind: input, shape index: {}]
  %s1 = inlined_call_operand.hbm [shape: f32[32,96], index: 1, kind: input, shape index: {}]
  %s2 = inlined_call_operand.hbm [shape: f32[1,96], index: 2, kind: input, shape index: {}]
  %s3 = inlined_call_operand.hbm [shape: f32[2,4,8,8], index: 3, kind: output, shape index: {0}]
  %s4 = inlined_call_operand.hbm [shape: f32[2,4,8,8], index: 4, kind: output, shape index: {1}]
  %s5 = inlined_call_operand.hbm [shape: f32[2,4,8,8], index: 5, kind: output, shape index: {2}]
  %6 = xla_tuple %s3, %s4, %s5
  %s7 = sld [smem:[#allocation0]]
  $region73: #{tpu_custom_call.1} parent=0
    _
  %s9 = ssub.s32 1, %s7
  %s10 = scalar_select 0, %s9, %s7
  $region1: #{tpu_custom_call.1} parent=0
    #allocation2 [shape = 'u8[8192]{0}', space=vmem, size = 0x2000, scoped, tag = 'input window, operand 0']
    #allocation3 [shape = 's32[2]{0}', space=sflag, size = 0x8, scoped, tag = 'scoped memory for tpu_custom_call.1']
    #allocation4 [shape = 's32[2]{0}', space=sflag, size = 0x8, scoped, tag = 'scoped memory for tpu_custom_call.1']
    #allocation5 [shape = 'u8[16384]{0}', space=vmem, size = 0x4000, scoped, tag = 'input window, operand 1, single buffered']
    #allocation6 [shape = 's32[1]{0}', space=sflag, size = 0x4, scoped, tag = 'scoped memory for tpu_custom_call.1']
    #allocation7 [shape = 'u8[512]{0}', space=vmem, size = 0x400, scoped, tag = 'input window, operand 2, single buffered']
    #allocation8 [shape = 'u8[32768]{0}', space=vmem, size = 0x8000, scoped, tag = 'output window, operand 0']
    #allocation9 [shape = 'u8[32768]{0}', space=vmem, size = 0x8000, scoped, tag = 'output window, operand 1']
    #allocation10 [shape = 's32[2]{0}', space=sflag, size = 0x8, scoped, tag = 'scoped memory for tpu_custom_call.1']
    #allocation11 [shape = 'u8[32768]{0}', space=vmem, size = 0x8000, scoped, tag = 'output window, operand 2']
    %11 = vsyncpa [#allocation3], 0
    %s12 = scalar_lea.sflag [#allocation3], 1
    %13 = vsyncpa %s12, 0
    %14 = vsyncpa [#allocation6], 0
    %15 = vsyncpa [#allocation4], 0
    %s16 = scalar_lea.sflag [#allocation4], 1
    %17 = vsyncpa %s16, 0
    %18 = vsyncpa [#allocation10], 0
    %s19 = scalar_lea.sflag [#allocation10], 1
    %20 = vsyncpa %s19, 0
    loop: start=0, step=1, limit=4
    $region2: #{tpu_custom_call.1} parent=1 // loop_pre_header
      _
    $region3: #{tpu_custom_call.1} parent=1 // loop_header
      %s22 = sphi 0, %s26
      %p23 = scmp.ge.s32.totalorder %s22, 4
      %s29 = sphi 0, %s41
      %s30 = sphi 0, %s37
      %s31 = sphi 0, %s29
      %s32 = sphi 0, %s30
      %s33 = sphi 0, %s31
      %s34 = sphi 0, %s32
      %s46 = sphi 0, %s48
      %s49 = sphi 0, %s46
      %s50 = sphi 0, %s49
      %s66 = sphi 0, %s50
      %s70 = sphi 0, %s70
      %s72 = sphi 0, %s70
      %s73 = sphi 0, %s72
      %s87 = sphi 0, %s73
      %s91 = sphi 0, %s91
      %s93 = sphi 0, %s91
      %s94 = sphi 0, %s93
      %s108 = sphi 0, %s94
      %s116 = sphi 0, %s118
      %s119 = sphi 0, %s116
      %s120 = sphi 0, %s119
      %s136 = sphi 0, %s120
      %s144 = sphi 0, %s146
      %s147 = sphi 0, %s144
      %s148 = sphi 0, %s147
      %s164 = sphi 0, %s148
      %s172 = sphi 0, %s174
      %s175 = sphi 0, %s172
      %s176 = sphi 0, %s175
      %s192 = sphi 0, %s176
    $region4: #{tpu_custom_call.1} parent=1 // loop_header_branch
      %25 = sbr.rel (%p23) target = $region8
    $region5: #{tpu_custom_call.1} parent=1 // loop_body
      %s27 = ssub.s32 %s22, 1
      %s28 = ssub.s32 %s22, 2
      %s35 = sadd.s32 1, %s30
      %p36 = scmp.ge.s32.totalorder %s35, 1
      %s37 = scalar_select %p36, 0, %s35
      %s38 = sadd.s32 1, %s29
      %s39 = scalar_select %p36, %s38, %s29
      %p40 = scmp.ge.s32.totalorder %s39, 2
      %s41 = scalar_select %p40, 0, %s39
      %s42 = ssub.s32 %s29, %s41
      %s43 = ssub.s32 %s30, %s37
      %s44 = sor.u32 %s42, %s43
      %p45 = scmp.eq.s32.totalorder %s44, 0
      %s47 = sadd.s32 %s46, 1
      %s48 = scalar_select %p45, %s46, %s47
      %p51 = pneg %p45
      %p52 = scmp.eq.s32.totalorder %s22, 1
      %p53 = por %p51, %p52
      %p54 = scmp.ne.s32.totalorder %s46, %s49
      %p55 = scmp.eq.s32.totalorder %s22, 0
      %p56 = por %p54, %p55
      %p57 = scmp.ne.s32.totalorder %s46, %s49
      %p58 = scmp.eq.s32.totalorder %s27, 1
      %p59 = por %p57, %p58
      %p60 = scmp.ne.s32.totalorder %s49, %s50
      %p61 = scmp.eq.s32.totalorder %s27, 0
      %p62 = por %p60, %p61
      %p63 = scmp.ne.s32.totalorder %s49, %s50
      %p64 = scmp.eq.s32.totalorder %s28, 1
      %p65 = por %p63, %p64
      %p67 = scmp.ne.s32.totalorder %s50, %s66
      %p68 = scmp.eq.s32.totalorder %s28, 0
      %p69 = por %p67, %p68
      %s71 = sadd.s32 %s70, 1
      %p74 = scmp.eq.s32.totalorder %s22, 1
      %p75 = scmp.ne.s32.totalorder %s70, %s72
      %p76 = scmp.eq.s32.totalorder %s22, 0
      %p77 = por %p75, %p76
      %p78 = scmp.ne.s32.totalorder %s70, %s72
      %p79 = scmp.eq.s32.totalorder %s27, 1
      %p80 = por %p78, %p79
      %p81 = scmp.ne.s32.totalorder %s72, %s73
      %p82 = scmp.eq.s32.totalorder %s27, 0
      %p83 = por %p81, %p82
      %p84 = scmp.ne.s32.totalorder %s72, %s73
      %p85 = scmp.eq.s32.totalorder %s28, 1
      %p86 = por %p84, %p85
      %p88 = scmp.ne.s32.totalorder %s73, %s87
      %p89 = scmp.eq.s32.totalorder %s28, 0
      %p90 = por %p88, %p89
      %s92 = sadd.s32 %s91, 1
      %p95 = scmp.eq.s32.totalorder %s22, 1
      %p96 = scmp.ne.s32.totalorder %s91, %s93
      %p97 = scmp.eq.s32.totalorder %s22, 0
      %p98 = por %p96, %p97
      %p99 = scmp.ne.s32.totalorder %s91, %s93
      %p100 = scmp.eq.s32.totalorder %s27, 1
      %p101 = por %p99, %p100
      %p102 = scmp.ne.s32.totalorder %s93, %s94
      %p103 = scmp.eq.s32.totalorder %s27, 0
      %p104 = por %p102, %p103
      %p105 = scmp.ne.s32.totalorder %s93, %s94
      %p106 = scmp.eq.s32.totalorder %s28, 1
      %p107 = por %p105, %p106
      %p109 = scmp.ne.s32.totalorder %s94, %s108
      %p110 = scmp.eq.s32.totalorder %s28, 0
      %p111 = por %p109, %p110
      %s112 = ssub.s32 %s29, %s41
      %s113 = ssub.s32 %s30, %s37
      %s114 = sor.u32 %s112, %s113
      %p115 = scmp.eq.s32.totalorder %s114, 0
      %s117 = sadd.s32 %s116, 1
      %s118 = scalar_select %p115, %s116, %s117
      %p121 = pneg %p115
      %p122 = scmp.eq.s32.totalorder %s22, 1
      %p123 = por %p121, %p122
      %p124 = scmp.ne.s32.totalorder %s116, %s119
      %p125 = scmp.eq.s32.totalorder %s22, 0
      %p126 = por %p124, %p125
      %p127 = scmp.ne.s32.totalorder %s116, %s119
      %p128 = scmp.eq.s32.totalorder %s27, 1
      %p129 = por %p127, %p128
      %p130 = scmp.ne.s32.totalorder %s119, %s120
      %p131 = scmp.eq.s32.totalorder %s27, 0
      %p132 = por %p130, %p131
      %p133 = scmp.ne.s32.totalorder %s119, %s120
      %p134 = scmp.eq.s32.totalorder %s28, 1
      %p135 = por %p133, %p134
      %p137 = scmp.ne.s32.totalorder %s120, %s136
      %p138 = scmp.eq.s32.totalorder %s28, 0
      %p139 = por %p137, %p138
      %s140 = ssub.s32 %s29, %s41
      %s141 = ssub.s32 %s30, %s37
      %s142 = sor.u32 %s140, %s141
      %p143 = scmp.eq.s32.totalorder %s142, 0
      %s145 = sadd.s32 %s144, 1
      %s146 = scalar_select %p143, %s144, %s145
      %p149 = pneg %p143
      %p150 = scmp.eq.s32.totalorder %s22, 1
      %p151 = por %p149, %p150
      %p152 = scmp.ne.s32.totalorder %s144, %s147
      %p153 = scmp.eq.s32.totalorder %s22, 0
      %p154 = por %p152, %p153
      %p155 = scmp.ne.s32.totalorder %s144, %s147
      %p156 = scmp.eq.s32.totalorder %s27, 1
      %p157 = por %p155, %p156
      %p158 = scmp.ne.s32.totalorder %s147, %s148
      %p159 = scmp.eq.s32.totalorder %s27, 0
      %p160 = por %p158, %p159
      %p161 = scmp.ne.s32.totalorder %s147, %s148
      %p162 = scmp.eq.s32.totalorder %s28, 1
      %p163 = por %p161, %p162
      %p165 = scmp.ne.s32.totalorder %s148, %s164
      %p166 = scmp.eq.s32.totalorder %s28, 0
      %p167 = por %p165, %p166
      %s168 = ssub.s32 %s29, %s41
      %s169 = ssub.s32 %s30, %s37
      %s170 = sor.u32 %s168, %s169
      %p171 = scmp.eq.s32.totalorder %s170, 0
      %s173 = sadd.s32 %s172, 1
      %s174 = scalar_select %p171, %s172, %s173
      %p177 = pneg %p171
      %p178 = scmp.eq.s32.totalorder %s22, 1
      %p179 = por %p177, %p178
      %p180 = scmp.ne.s32.totalorder %s172, %s175
      %p181 = scmp.eq.s32.totalorder %s22, 0
      %p182 = por %p180, %p181
      %p183 = scmp.ne.s32.totalorder %s172, %s175
      %p184 = scmp.eq.s32.totalorder %s27, 1
      %p185 = por %p183, %p184
      %p186 = scmp.ne.s32.totalorder %s175, %s176
      %p187 = scmp.eq.s32.totalorder %s27, 0
      %p188 = por %p186, %p187
      %p189 = scmp.ne.s32.totalorder %s175, %s176
      %p190 = scmp.eq.s32.totalorder %s28, 1
      %p191 = por %p189, %p190
      %p193 = scmp.ne.s32.totalorder %s176, %s192
      %p194 = scmp.eq.s32.totalorder %s28, 0
      %p195 = por %p193, %p194
      %p196 = scmp.le.s32.totalorder 1, %s22
      %p197 = scmp.lt.s32.totalorder %s22, 3
      %p198 = pnand %p196, %p197
      %p199 = pneg %p198
      // Predicated region
      $region9: #{tpu_custom_call.1} parent=5 // pred_check
        _
      $region10: #{tpu_custom_call.1} parent=5 // pred_check_branch
        %201 = sbr.rel (%p198) target = $region12
      $region11: #{tpu_custom_call.1} parent=5 // pred_region
        %s202 = ssub.s32 %s22, 1
        // Predicated region
        $region13: #{tpu_custom_call.1} parent=11 // pred_check
          %p203 = pneg %p83
        $region14: #{tpu_custom_call.1} parent=11 // pred_check_branch
          %205 = sbr.rel (%p203) target = $region16
        $region15: #{tpu_custom_call.1} parent=11 // pred_region
          %s207 = ssub.s32 512, 512
          %208 = vsyncadd [#allocation6], %s207
          %s209 = sshll.u32 [#allocation5], 4
          %s210 = int_to_ptr.vmem [resolvable:$true] %s209
          %215 = dma.hbm_to_vmem [thread:$0]  %s1, 512, %s210, [#allocation6], 128, 128, 8
        $region16: #{tpu_custom_call.1} parent=11 // pred_fallthru
          _
        // Predicated region
        $region17: #{tpu_custom_call.1} parent=11 // pred_check
          %p216 = pneg %p104
        $region18: #{tpu_custom_call.1} parent=11 // pred_check_branch
          %218 = sbr.rel (%p216) target = $region20
        $region19: #{tpu_custom_call.1} parent=11 // pred_region
          %s220 = ssub.s32 16, 16
          %221 = vsyncadd [#allocation6], %s220
          %s223 = sshll.u32 [#allocation7], 4
          %s224 = int_to_ptr.vmem [resolvable:$true] %s223
          %226 = dma.hbm_to_vmem [thread:$0]  %s2, 16, %s224, [#allocation6]
        $region20: #{tpu_custom_call.1} parent=11 // pred_fallthru
          _
      $region12: #{tpu_custom_call.1} parent=5 // pred_fallthru
        _
      %p227 = scmp.lt.s32.totalorder %s22, 2
      // Predicated region
      $region21: #{tpu_custom_call.1} parent=5 // pred_check
        %p228 = pneg %p227
      $region22: #{tpu_custom_call.1} parent=5 // pred_check_branch
        %230 = sbr.rel (%p228) target = $region24
      $region23: #{tpu_custom_call.1} parent=5 // pred_region
        // Predicated region
        $region25: #{tpu_custom_call.1} parent=23 // pred_check
          %p231 = pneg %p56
        $region26: #{tpu_custom_call.1} parent=23 // pred_check_branch
          %233 = sbr.rel (%p231) target = $region28
        $region27: #{tpu_custom_call.1} parent=23 // pred_region
          %s234 = sand.u32 %s46, 1
          %s235 = scalar_lea.sflag [#allocation3], %s234
          %s236 = sand.u32 %s46, 1
          %s237 = smul.addr %s236, 8
          %s238 = scalar_lea.vmem [#allocation2], %s237
          %s240 = ssub.s32 128, 128
          %241 = vsyncadd %s235, %s240
          %s242 = sadd.s32 %s30, %s29
          %s243 = smul.addr %s242, 128
          %s244 = scalar_lea.hbm %s0, %s243
          %s246 = sshll.u32 %s238, 4
          %s247 = int_to_ptr.vmem [resolvable:$true] %s246
          %249 = dma.hbm_to_vmem [thread:$0]  %s244, 128, %s247, %s235
        $region28: #{tpu_custom_call.1} parent=23 // pred_fallthru
          _
      $region24: #{tpu_custom_call.1} parent=5 // pred_fallthru
        _
      %p250 = scmp.le.s32.totalorder 1, %s22
      %p251 = scmp.lt.s32.totalorder %s22, 3
      %p252 = pnand %p250, %p251
      %p253 = pneg %p252
      // Predicated region
      $region29: #{tpu_custom_call.1} parent=5 // pred_check
        _
      $region30: #{tpu_custom_call.1} parent=5 // pred_check_branch
        %255 = sbr.rel (%p252) target = $region32
      $region31: #{tpu_custom_call.1} parent=5 // pred_region
        %s256 = ssub.s32 %s22, 1
        %s257 = sand.u32 %s49, 1
        %s258 = scalar_lea.sflag [#allocation3], %s257
        %s259 = sand.u32 %s49, 1
        %s260 = smul.addr %s259, 8
        %s261 = scalar_lea.vmem [#allocation2], %s260
        // Predicated region
        $region33: #{tpu_custom_call.1} parent=31 // pred_check
          %p262 = pneg %p62
        $region34: #{tpu_custom_call.1} parent=31 // pred_check_branch
          %264 = sbr.rel (%p262) target = $region36
        $region35: #{tpu_custom_call.1} parent=31 // pred_region
          %265 = dma.done %s258, 128
        $region36: #{tpu_custom_call.1} parent=31 // pred_fallthru
          _
        // Predicated region
        $region37: #{tpu_custom_call.1} parent=31 // pred_check
          %p266 = pneg %p83
        $region38: #{tpu_custom_call.1} parent=31 // pred_check_branch
          %268 = sbr.rel (%p266) target = $region40
        $region39: #{tpu_custom_call.1} parent=31 // pred_region
          %269 = dma.done [#allocation6], 512
        $region40: #{tpu_custom_call.1} parent=31 // pred_fallthru
          _
        // Predicated region
        $region41: #{tpu_custom_call.1} parent=31 // pred_check
          %p270 = pneg %p104
        $region42: #{tpu_custom_call.1} parent=31 // pred_check_branch
          %272 = sbr.rel (%p270) target = $region44
        $region43: #{tpu_custom_call.1} parent=31 // pred_region
          %273 = dma.done [#allocation6], 16
        $region44: #{tpu_custom_call.1} parent=31 // pred_fallthru
          _
        %s274 = sand.u32 %s49, 1
        %s275 = scalar_lea.sflag [#allocation3], %s274
        %s276 = sand.u32 %s49, 1
        %s277 = smul.addr %s276, 8
        %s278 = scalar_lea.vmem [#allocation2], %s277
        %p279 = pneg %p62
        %p280 = pneg %p59
        %p281 = pneg %p83
        %p282 = pneg %p80
        %p283 = pneg %p104
        %p284 = pneg %p101
        %p285 = pneg %p132
        %p286 = pneg %p129
        %s287 = sand.u32 %s119, 1
        %s288 = scalar_lea.sflag [#allocation4], %s287
        %s289 = sand.u32 %s119, 1
        %s290 = smul.addr %s289, 32
        %s291 = scalar_lea.vmem [#allocation8], %s290
        %p292 = pneg %p160
        %p293 = pneg %p157
        %s294 = sand.u32 %s27, 1
        %s295 = scalar_lea.sflag [#allocation10], %s294
        %s296 = sand.u32 %s147, 1
        %s297 = smul.addr %s296, 32
        %s298 = scalar_lea.vmem [#allocation9], %s297
        %p299 = pneg %p188
        %p300 = pneg %p185
        %s301 = sand.u32 %s27, 1
        %s302 = scalar_lea.sflag [#allocation10], %s301
        %s303 = sand.u32 %s175, 1
        %s304 = smul.addr %s303, 32
        %s305 = scalar_lea.vmem [#allocation11], %s304
        %v306 = vld [vmem:[%s261] sm:$0xff]
        %v307 = vld [vmem:[#allocation5] sm:$0xff]
        %v308 = vld [vmem:[#allocation5 + $0x8] sm:$0xff]
        %v309 = vld [vmem:[#allocation5 + $0x10] sm:$0xff]
        %v310 = vld [vmem:[#allocation5 + $0x18] sm:$0xff]
        %v311 = vld [vmem:[#allocation7] sm:$0x1]
        %v313 = vlaneseq
        %v314 = vshrl.u32 %v313, 7
        %v315 = vsub.s32 0, %v314
        %v316 = vrot.slane %v311, %v315
        %vm318 = vcmask 261120
        %v320 = vsel %vm318, %v306, 0
        %322 = vmatprep.subr.mxu0 0.0
        %323 = vmatpush1.msra.mxu0 %v307
        %324 = vmatprep.subr.mxu0 0.0
        %325 = vmatpush1.msra.mxu0 %v308
        %326 = vmatprep.subr.mxu0 0.0
        %327 = vmatpush1.msra.mxu0 %v309
        %328 = vmatprep.subr.mxu0 0.0
        %329 = vmatpush1.msra.mxu0 %v310
        %330 = vmatprep.subr.mxu0 0.0
        %331 = vmatpush1.msra.mxu0 0.0
        %332 = vmatprep.subr.mxu0 0.0
        %333 = vmatpush1.msra.mxu0 0.0
        %334 = vmatprep.subr.mxu0 0.0
        %335 = vmatpush1.msra.mxu0 0.0
        %336 = vmatprep.subr.mxu0 0.0
        %337 = vmatpush1.msra.mxu0 0.0
        %338 = vmatprep.subr.mxu0 0.0
        %339 = vmatpush1.msra.mxu0 0.0
        %340 = vmatprep.subr.mxu0 0.0
        %341 = vmatpush1.msra.mxu0 0.0
        %342 = vmatprep.subr.mxu0 0.0
        %343 = vmatpush1.msra.mxu0 0.0
        %344 = vmatprep.subr.mxu0 0.0
        %345 = vmatpush1.msra.mxu0 0.0
        %346 = vmatprep.subr.mxu0 0.0
        %347 = vmatpush1.msra.mxu0 0.0
        %348 = vmatprep.subr.mxu0 0.0
        %349 = vmatpush1.msra.mxu0 0.0
        %350 = vmatprep.subr.mxu0 0.0
        %351 = vmatpush1.msra.mxu0 0.0
        %352 = vmatprep.subr.mxu0 0.0
        %353 = vmatpush1.msra.mxu0 0.0
        %354 = vmatprep.subr.mxu0 0.0
        %355 = vmatpush1.msra.mxu0 0.0
        %356 = vmatprep.subr.mxu0 0.0
        %357 = vmatpush1.msra.mxu0 0.0
        %358 = vmatprep.subr.mxu0 0.0
        %359 = vmatpush1.msra.mxu0 0.0
        %360 = vmatprep.subr.mxu0 0.0
        %361 = vmatpush1.msra.mxu0 0.0
        %362 = vmatprep.subr.mxu0 0.0
        %363 = vmatpush1.msra.mxu0 0.0
        %364 = vmatprep.subr.mxu0 0.0
        %365 = vmatpush1.msra.mxu0 0.0
        %366 = vmatprep.subr.mxu0 0.0
        %367 = vmatpush1.msra.mxu0 0.0
        %368 = vmatprep.subr.mxu0 0.0
        %369 = vmatpush1.msra.mxu0 0.0
        %370 = vmatprep.subr.mxu0 0.0
        %371 = vmatpush1.msra.mxu0 0.0
        %372 = vmatprep.subr.mxu0 0.0
        %373 = vmatpush1.msra.mxu0 0.0
        %374 = vmatprep.subr.mxu0 0.0
        %375 = vmatpush1.msra.mxu0 0.0
        %376 = vmatprep.subr.mxu0 0.0
        %377 = vmatpush1.msra.mxu0 0.0
        %378 = vmatprep.subr.mxu0 0.0
        %379 = vmatpush1.msra.mxu0 0.0
        %380 = vmatprep.subr.mxu0 0.0
        %381 = vmatpush1.msra.mxu0 0.0
        %382 = vmatprep.subr.mxu0 0.0
        %383 = vmatpush1.msra.mxu0 0.0
        %384 = vmatprep.subr.mxu0 0.0
        %385 = vmatpush1.msra.mxu0 0.0
        %386 = vmatprep.mubr.f32.mxu0 0.0
        %387 = vmatmul.mubr.f32.gmra.mrb[0].mxu0 %v320
        %v388 = vpop.f32.mrb[0].mxu0
        %v389 = vadd.f32 %v316, %v388
        %v390 = vpop.f32.mrb[0].mxu0
        %391 = vdwg.mxu0
        %vm392 = vcmask 64512
        %393 = vst.msk [vmem:[%s291] sm:$0xff] %vm392, %v389
        %395 = vrot.lane.b32.xlu0 %v389, 96
        %v396 = vpop.permute.xlu0 %395
        %398 = vst.msk [vmem:[%s298] sm:$0xff] %vm392, %v396
        %399 = vrot.lane.b32.xlu0 %v389, 64
        %v400 = vpop.permute.xlu0 %399
        %402 = vst.msk [vmem:[%s305] sm:$0xff] %vm392, %v400
        %403 = vrot.lane.b32.xlu0 %v389, 120
        %v404 = vpop.permute.xlu0 %403
        %s406 = scalar_lea.vmem %s291, 8 [#allocation8]
        %407 = vst.msk [vmem:[%s406] sm:$0xff] %vm392, %v404
        %408 = vrot.lane.b32.xlu0 %v389, 88
        %v409 = vpop.permute.xlu0 %408
        %s411 = scalar_lea.vmem %s298, 8 [#allocation9]
        %412 = vst.msk [vmem:[%s411] sm:$0xff] %vm392, %v409
        %413 = vrot.lane.b32.xlu0 %v389, 56
        %v414 = vpop.permute.xlu0 %413
        %s416 = scalar_lea.vmem %s305, 8 [#allocation11]
        %417 = vst.msk [vmem:[%s416] sm:$0xff] %vm392, %v414
        %418 = vrot.lane.b32.xlu0 %v389, 112
        %v419 = vpop.permute.xlu0 %418
        %s421 = scalar_lea.vmem %s291, 16 [#allocation8]
        %422 = vst.msk [vmem:[%s421] sm:$0xff] %vm392, %v419
        %423 = vrot.lane.b32.xlu0 %v389, 80
        %v424 = vpop.permute.xlu0 %423
        %s426 = scalar_lea.vmem %s298, 16 [#allocation9]
        %427 = vst.msk [vmem:[%s426] sm:$0xff] %vm392, %v424
        %428 = vrot.lane.b32.xlu0 %v389, 48
        %v429 = vpop.permute.xlu0 %428
        %s431 = scalar_lea.vmem %s305, 16 [#allocation11]
        %432 = vst.msk [vmem:[%s431] sm:$0xff] %vm392, %v429
        %433 = vrot.lane.b32.xlu0 %v389, 104
        %v434 = vpop.permute.xlu0 %433
        %s436 = scalar_lea.vmem %s291, 24 [#allocation8]
        %437 = vst.msk [vmem:[%s436] sm:$0xff] %vm392, %v434
        %438 = vrot.lane.b32.xlu0 %v389, 72
        %v439 = vpop.permute.xlu0 %438
        %s441 = scalar_lea.vmem %s298, 24 [#allocation9]
        %442 = vst.msk [vmem:[%s441] sm:$0xff] %vm392, %v439
        %443 = vrot.lane.b32.xlu0 %v389, 40
        %v444 = vpop.permute.xlu0 %443
        %s446 = scalar_lea.vmem %s305, 24 [#allocation11]
        %447 = vst.msk [vmem:[%s446] sm:$0xff] %vm392, %v444
        %s448 = sand.u32 %s119, 1
        %s449 = scalar_lea.sflag [#allocation4], %s448
        %s450 = sand.u32 %s119, 1
        %s451 = smul.addr %s450, 32
        %s452 = scalar_lea.vmem [#allocation8], %s451
        %s453 = sand.u32 %s27, 1
        %s454 = scalar_lea.sflag [#allocation10], %s453
        %s455 = sand.u32 %s147, 1
        %s456 = smul.addr %s455, 32
        %s457 = scalar_lea.vmem [#allocation9], %s456
        %s458 = sand.u32 %s27, 1
        %s459 = scalar_lea.sflag [#allocation10], %s458
        %s460 = sand.u32 %s175, 1
        %s461 = smul.addr %s460, 32
        %s462 = scalar_lea.vmem [#allocation11], %s461
        // Predicated region
        $region45: #{tpu_custom_call.1} parent=31 // pred_check
          %p463 = pneg %p129
        $region46: #{tpu_custom_call.1} parent=31 // pred_check_branch
          %465 = sbr.rel (%p463) target = $region48
        $region47: #{tpu_custom_call.1} parent=31 // pred_region
          %s467 = ssub.s32 512, 512
          %468 = vsyncadd %s449, %s467
          %s469 = smul.addr %s31, 4
          %s470 = sadd.s32 %s32, %s469
          %s471 = smul.addr %s470, 128
          %s472 = scalar_lea.hbm %s3, %s471
          %s473 = sshll.u32 %s452, 4
          %s474 = int_to_ptr.vmem [resolvable:$true] %s473
          %479 = dma.vmem_to_hbm [thread:$0]  %s474, 512, %s472, %s449, 128, 128, 8
        $region48: #{tpu_custom_call.1} parent=31 // pred_fallthru
          _
        // Predicated region
        $region49: #{tpu_custom_call.1} parent=31 // pred_check
          %p480 = pneg %p157
        $region50: #{tpu_custom_call.1} parent=31 // pred_check_branch
          %482 = sbr.rel (%p480) target = $region52
        $region51: #{tpu_custom_call.1} parent=31 // pred_region
          %s484 = ssub.s32 512, 512
          %485 = vsyncadd %s454, %s484
          %s486 = smul.addr %s31, 4
          %s487 = sadd.s32 %s32, %s486
          %s488 = smul.addr %s487, 128
          %s489 = scalar_lea.hbm %s4, %s488
          %s490 = sshll.u32 %s457, 4
          %s491 = int_to_ptr.vmem [resolvable:$true] %s490
          %496 = dma.vmem_to_hbm [thread:$0]  %s491, 512, %s489, %s454, 128, 128, 8
        $region52: #{tpu_custom_call.1} parent=31 // pred_fallthru
          _
        // Predicated region
        $region53: #{tpu_custom_call.1} parent=31 // pred_check
          %p497 = pneg %p185
        $region54: #{tpu_custom_call.1} parent=31 // pred_check_branch
          %499 = sbr.rel (%p497) target = $region56
        $region55: #{tpu_custom_call.1} parent=31 // pred_region
          %s501 = ssub.s32 512, 512
          %502 = vsyncadd %s459, %s501
          %s503 = smul.addr %s31, 4
          %s504 = sadd.s32 %s32, %s503
          %s505 = smul.addr %s504, 128
          %s506 = scalar_lea.hbm %s5, %s505
          %s507 = sshll.u32 %s462, 4
          %s508 = int_to_ptr.vmem [resolvable:$true] %s507
          %513 = dma.vmem_to_hbm [thread:$0]  %s508, 512, %s506, %s459, 128, 128, 8
        $region56: #{tpu_custom_call.1} parent=31 // pred_fallthru
          _
      $region32: #{tpu_custom_call.1} parent=5 // pred_fallthru
        _
      %p514 = scmp.le.s32.totalorder 2, %s22
      // Predicated region
      $region57: #{tpu_custom_call.1} parent=5 // pred_check
        %p515 = pneg %p514
      $region58: #{tpu_custom_call.1} parent=5 // pred_check_branch
        %517 = sbr.rel (%p515) target = $region60
      $region59: #{tpu_custom_call.1} parent=5 // pred_region
        %s518 = ssub.s32 %s22, 2
        // Predicated region
        $region61: #{tpu_custom_call.1} parent=59 // pred_check
          %p519 = pneg %p135
        $region62: #{tpu_custom_call.1} parent=59 // pred_check_branch
          %521 = sbr.rel (%p519) target = $region64
        $region63: #{tpu_custom_call.1} parent=59 // pred_region
          %s522 = sand.u32 %s120, 1
          %s523 = scalar_lea.sflag [#allocation4], %s522
          %s524 = sand.u32 %s120, 1
          %s525 = smul.addr %s524, 32
          %s526 = scalar_lea.vmem [#allocation8], %s525
          %527 = dma.done %s523, 512
        $region64: #{tpu_custom_call.1} parent=59 // pred_fallthru
          _
        // Predicated region
        $region65: #{tpu_custom_call.1} parent=59 // pred_check
          %p528 = pneg %p163
        $region66: #{tpu_custom_call.1} parent=59 // pred_check_branch
          %530 = sbr.rel (%p528) target = $region68
        $region67: #{tpu_custom_call.1} parent=59 // pred_region
          %s531 = sand.u32 %s28, 1
          %s532 = scalar_lea.sflag [#allocation10], %s531
          %s533 = sand.u32 %s148, 1
          %s534 = smul.addr %s533, 32
          %s535 = scalar_lea.vmem [#allocation9], %s534
          %536 = dma.done %s532, 512
        $region68: #{tpu_custom_call.1} parent=59 // pred_fallthru
          _
        // Predicated region
        $region69: #{tpu_custom_call.1} parent=59 // pred_check
          %p537 = pneg %p191
        $region70: #{tpu_custom_call.1} parent=59 // pred_check_branch
          %539 = sbr.rel (%p537) target = $region72
        $region71: #{tpu_custom_call.1} parent=59 // pred_region
          %s540 = sand.u32 %s28, 1
          %s541 = scalar_lea.sflag [#allocation10], %s540
          %s542 = sand.u32 %s176, 1
          %s543 = smul.addr %s542, 32
          %s544 = scalar_lea.vmem [#allocation11], %s543
          %545 = dma.done %s541, 512
        $region72: #{tpu_custom_call.1} parent=59 // pred_fallthru
          _
      $region60: #{tpu_custom_call.1} parent=5 // pred_fallthru
        _
    $region6: #{tpu_custom_call.1} parent=1 // loop_footer
      %s26 = sadd.s32 1, %s22
    $region7: #{tpu_custom_call.1} parent=1 // loop_footer_branch
      %21 = sbr.rel target = $region3
    $region8: #{tpu_custom_call.1} parent=1 // loop_exit
      _
    %546 = vsyncpa [#allocation3], 1
    %s547 = scalar_lea.sflag [#allocation3], 1
    %548 = vsyncpa %s547, 1
    %549 = vsyncpa [#allocation6], 1
    %550 = vsyncpa [#allocation4], 1
    %s551 = scalar_lea.sflag [#allocation4], 1
    %552 = vsyncpa %s551, 1
    %553 = vsyncpa [#allocation10], 1
    %s554 = scalar_lea.sflag [#allocation10], 1
    %555 = vsyncpa %s554, 1

</llo_original>
